<compile_context>
chip_gen: v5e
topology: v5e:2x2
jax: 0.10.0
libtpu: 0.0.40
codegen_flags: <defaults>
</compile_context>

<pallas_src>
import functools

import jax
import jax.numpy as jnp
from jax.experimental import pallas as pl
from jax.experimental.pallas import tpu as pltpu


def _reward_head_kernel(x_ref, w1_ref, b1_ref, w2_ref, b2_ref, o_ref):
    # First linear: bf16 MXU matmul, f32 accumulate.
    x_bf16 = x_ref[...].astype(jnp.bfloat16)
    h = jnp.dot(x_bf16, w1_ref[...], preferred_element_type=jnp.float32)
    # Bias + ReLU in f32 on the VPU (free under the MXU-bound loop).
    h = jnp.maximum(h + b1_ref[...], 0.0)
    # TODO(synk): dropout skipped here (identity in eval mode).
    # Second linear on the 128-lane-padded principle axis, then sigmoid (EUP).
    logits = jnp.dot(h.astype(jnp.bfloat16), w2_ref[...],
                     preferred_element_type=jnp.float32)
    logits = logits + b2_ref[...]
    o_ref[...] = jax.nn.sigmoid(logits).astype(o_ref.dtype)


def _round_up(n, m):
    return ((n + m - 1) // m) * m


@functools.partial(jax.jit, static_argnames=("block_m",))
def constitutional_reward_head(x, w1, b1, w2, b2, *, block_m=512):
    """x: (B, H) f32; w1: (H, H//2); b1: (H//2,); w2: (H//2, P); b2: (P,).

    Returns sigmoid(relu(x @ w1 + b1) @ w2 + b2), shape (B, P), f32.
    """
    B, H = x.shape
    Hh = w1.shape[1]
    P = w2.shape[1]

    # ---- lane-dense output: pad principle axis to a multiple of 128 --------
    P_pad = _round_up(max(P, 128), 128)

    # ---- bf16 weights (halve VMEM/DMA, double MXU throughput) --------------
    w1_bf = w1.astype(jnp.bfloat16)
    w2_pad = jnp.zeros((Hh, P_pad), jnp.bfloat16).at[:, :P].set(
        w2.astype(jnp.bfloat16))
    b1_2d = b1.reshape(1, Hh).astype(jnp.float32)
    b2_pad = jnp.zeros((1, P_pad), jnp.float32).at[:, :P].set(
        b2.reshape(1, P).astype(jnp.float32))

    # ---- batch tiling -------------------------------------------------------
    tm = min(block_m, _round_up(B, 8))          # multiple of 8 sublanes
    B_pad = _round_up(B, tm)
    if B_pad != B:
        x = jnp.pad(x, ((0, B_pad - B), (0, 0)))
    grid = (B_pad // tm,)

    # ---- VMEM budget (x/out tiles double-buffered + resident weights) ------
    x_tile_bytes = tm * H * 4
    out_tile_bytes = tm * P_pad * 4
    weight_bytes = H * Hh * 2 + Hh * P_pad * 2 + Hh * 4 + P_pad * 4
    h_bytes = tm * Hh * (4 + 2)
    est_bytes = 2 * (x_tile_bytes + out_tile_bytes + weight_bytes) + h_bytes
    vmem_limit = int(min(max(2 * est_bytes, 16 * 2 ** 20), 64 * 2 ** 20))

    cost = pl.CostEstimate(
        flops=2 * B_pad * H * Hh + 2 * B_pad * Hh * P_pad,
        transcendentals=B_pad * P_pad,          # sigmoid exp
        bytes_accessed=(B_pad * H * 4 + weight_bytes + B_pad * P_pad * 4),
    )

    out = pl.pallas_call(
        _reward_head_kernel,
        out_shape=jax.ShapeDtypeStruct((B_pad, P_pad), jnp.float32),
        grid_spec=pl.GridSpec(
            grid=grid,
            in_specs=[
                pl.BlockSpec((tm, H), lambda i: (i, 0)),       # x tile streams
                pl.BlockSpec((H, Hh), lambda i: (0, 0)),       # W1 resident
                pl.BlockSpec((1, Hh), lambda i: (0, 0)),       # b1 resident
                pl.BlockSpec((Hh, P_pad), lambda i: (0, 0)),   # W2 resident
                pl.BlockSpec((1, P_pad), lambda i: (0, 0)),    # b2 resident
            ],
            out_specs=pl.BlockSpec((tm, P_pad), lambda i: (i, 0)),
        ),
        compiler_params=pltpu.CompilerParams(
            dimension_semantics=("parallel",),   # shard batch tiles across TCs
            vmem_limit_bytes=vmem_limit,
        ),
        cost_estimate=cost,
    )(x, w1_bf, b1_2d, w2_pad, b2_pad)

    # Drop batch padding and the zero-padded principle columns.
    return out[:B, :P]


def _init_params(key, hidden_size, num_principles):
    """Deterministic synthetic init mimicking nn.Linear shapes."""
    k1, k2, k3, k4 = jax.random.split(key, 4)
    h2 = hidden_size // 2
    # nn.Linear stores weight as (out, in); we keep (in, out) for x @ W.
    w1 = jax.random.normal(k1, (hidden_size, h2), jnp.float32) * (
        1.0 / jnp.sqrt(hidden_size))
    b1 = jax.random.normal(k2, (h2,), jnp.float32) * 0.01
    w2 = jax.random.normal(k3, (h2, num_principles), jnp.float32) * (
        1.0 / jnp.sqrt(h2))
    b2 = jax.random.normal(k4, (num_principles,), jnp.float32) * 0.01
    return w1, b1, w2, b2


def _reference(x, w1, b1, w2, b2):
    """Pure-JAX reference mimicking the kernel's bf16 MXU inputs."""
    xb = x.astype(jnp.bfloat16).astype(jnp.float32)
    w1b = w1.astype(jnp.bfloat16).astype(jnp.float32)
    h = jnp.maximum(xb @ w1b + b1, 0.0)
    hb = h.astype(jnp.bfloat16).astype(jnp.float32)
    w2b = w2.astype(jnp.bfloat16).astype(jnp.float32)
    return jax.nn.sigmoid(hb @ w2b + b2)


if __name__ == "__main__":
    key = jax.random.PRNGKey(0)
    batch = 2
    hidden_size = 32
    num_principles = 8

    kx, kp = jax.random.split(key)
    x = jax.random.normal(kx, (batch, hidden_size), jnp.float32)
    w1, b1, w2, b2 = _init_params(kp, hidden_size, num_principles)

    out = constitutional_reward_head(x, w1, b1, w2, b2)
    out = jax.block_until_ready(out)

    ref = _reference(x, w1, b1, w2, b2)
    assert out.shape == (batch, num_principles)
    assert jnp.allclose(out, ref, atol=2e-3, rtol=2e-3), (
        f"max abs err {jnp.max(jnp.abs(out - ref))}")

    # Loose sanity vs the full-f32 reference (bf16 cast error only).
    ref_f32 = jax.nn.sigmoid(jnp.maximum(x @ w1 + b1, 0.0) @ w2 + b2)
    assert jnp.allclose(out, ref_f32, atol=3e-2, rtol=3e-2)

    print("KERNEL_OK")
</pallas_src>

<mosaic_0001>
module attributes {stable_mosaic.version = 11 : i64} {
  func.func @_reward_head_kernel(%arg0: i32, %arg1: memref<8x32xf32, #tpu.memory_space<vmem>>, %arg2: memref<32x16xbf16, #tpu.memory_space<vmem>>, %arg3: memref<1x16xf32, #tpu.memory_space<vmem>>, %arg4: memref<16x128xbf16, #tpu.memory_space<vmem>>, %arg5: memref<1x128xf32, #tpu.memory_space<vmem>>, %arg6: memref<8x128xf32, #tpu.memory_space<vmem>>) attributes {dimension_semantics = [#tpu.dimension_semantics<parallel>], iteration_bounds = array<i64: 1>, scalar_prefetch = 0 : i64, scratch_operands = 0 : i64, tpu.core_type = #tpu.core_type<tc>, window_params = [{transform_indices = @transform_0, window_bounds = array<i64: 8, 32>}, {pipeline_mode = #tpu.pipeline_mode<synchronous>, transform_indices = @transform_1, window_bounds = array<i64: 32, 16>}, {pipeline_mode = #tpu.pipeline_mode<synchronous>, transform_indices = @transform_2, window_bounds = array<i64: 1, 16>}, {pipeline_mode = #tpu.pipeline_mode<synchronous>, transform_indices = @transform_3, window_bounds = array<i64: 16, 128>}, {pipeline_mode = #tpu.pipeline_mode<synchronous>, transform_indices = @transform_4, window_bounds = array<i64: 1, 128>}, {transform_indices = @transform_5, window_bounds = array<i64: 8, 128>}]} {
    %c0 = arith.constant 0 : index
    %c0_0 = arith.constant 0 : index
    %0 = vector.load %arg1[%c0, %c0_0] : memref<8x32xf32, #tpu.memory_space<vmem>>, vector<8x32xf32>
    %1 = arith.truncf %0 : vector<8x32xf32> to vector<8x32xbf16>
    %c0_1 = arith.constant 0 : index
    %c0_2 = arith.constant 0 : index
    %2 = vector.load %arg2[%c0_1, %c0_2] : memref<32x16xbf16, #tpu.memory_space<vmem>>, vector<32x16xbf16>
    %cst = arith.constant dense<0.000000e+00> : vector<8x16xf32>
    %3 = tpu.matmul %1, %2, %cst {dimension_numbers = #tpu.dot_dimension_numbers<[1], [0], [0], [1], [0, 0, 1, 1], [], []>} : vector<8x32xbf16>, vector<32x16xbf16>, vector<8x16xf32> -> vector<8x16xf32>
    %c0_3 = arith.constant 0 : index
    %c0_4 = arith.constant 0 : index
    %4 = vector.load %arg3[%c0_3, %c0_4] : memref<1x16xf32, #tpu.memory_space<vmem>>, vector<1x16xf32>
    %5 = vector.broadcast %4 : vector<1x16xf32> to vector<8x16xf32>
    %6 = arith.addf %3, %5 : vector<8x16xf32>
    %cst_5 = arith.constant 0.000000e+00 : f32
    %7 = vector.broadcast %cst_5 : f32 to vector<8x16xf32>
    %8 = arith.maximumf %6, %7 : vector<8x16xf32>
    %9 = arith.truncf %8 : vector<8x16xf32> to vector<8x16xbf16>
    %c0_6 = arith.constant 0 : index
    %c0_7 = arith.constant 0 : index
    %10 = vector.load %arg4[%c0_6, %c0_7] : memref<16x128xbf16, #tpu.memory_space<vmem>>, vector<16x128xbf16>
    %cst_8 = arith.constant dense<0.000000e+00> : vector<8x128xf32>
    %11 = tpu.matmul %9, %10, %cst_8 {dimension_numbers = #tpu.dot_dimension_numbers<[1], [0], [0], [1], [0, 0, 1, 1], [], []>} : vector<8x16xbf16>, vector<16x128xbf16>, vector<8x128xf32> -> vector<8x128xf32>
    %c0_9 = arith.constant 0 : index
    %c0_10 = arith.constant 0 : index
    %12 = vector.load %arg5[%c0_9, %c0_10] : memref<1x128xf32, #tpu.memory_space<vmem>>, vector<1x128xf32>
    %13 = vector.broadcast %12 : vector<1x128xf32> to vector<8x128xf32>
    %14 = arith.addf %11, %13 : vector<8x128xf32>
    %15 = arith.negf %14 : vector<8x128xf32>
    %16 = math.exp %15 : vector<8x128xf32>
    %cst_11 = arith.constant 1.000000e+00 : f32
    %17 = vector.broadcast %cst_11 : f32 to vector<8x128xf32>
    %18 = arith.addf %17, %16 : vector<8x128xf32>
    %19 = arith.divf %17, %18 : vector<8x128xf32>
    %c0_12 = arith.constant 0 : index
    %c0_13 = arith.constant 0 : index
    %20 = vector.load %arg6[%c0_12, %c0_13] : memref<8x128xf32, #tpu.memory_space<vmem>>, vector<8x128xf32>
    tpu.vector_store %arg6[%c0_12, %c0_13], %19 {strides = array<i32>} : memref<8x128xf32, #tpu.memory_space<vmem>>, vector<8x128xf32>,
    return
  }
  func.func @transform_0(%arg0: i32) -> (i32, i32) {
    %c0_i32 = arith.constant 0 : i32
    %c0_i32_0 = arith.constant 0 : i32
    return %arg0, %c0_i32 : i32, i32
  }
  func.func @transform_1(%arg0: i32) -> (i32, i32) {
    %c0_i32 = arith.constant 0 : i32
    %c0_i32_0 = arith.constant 0 : i32
    %c0_i32_1 = arith.constant 0 : i32
    return %c0_i32, %c0_i32_0 : i32, i32
  }
  func.func @transform_2(%arg0: i32) -> (i32, i32) {
    %c0_i32 = arith.constant 0 : i32
    %c0_i32_0 = arith.constant 0 : i32
    %c0_i32_1 = arith.constant 0 : i32
    return %c0_i32, %c0_i32_0 : i32, i32
  }
  func.func @transform_3(%arg0: i32) -> (i32, i32) {
    %c0_i32 = arith.constant 0 : i32
    %c0_i32_0 = arith.constant 0 : i32
    %c0_i32_1 = arith.constant 0 : i32
    return %c0_i32, %c0_i32_0 : i32, i32
  }
  func.func @transform_4(%arg0: i32) -> (i32, i32) {
    %c0_i32 = arith.constant 0 : i32
    %c0_i32_0 = arith.constant 0 : i32
    %c0_i32_1 = arith.constant 0 : i32
    return %c0_i32, %c0_i32_0 : i32, i32
  }
  func.func @transform_5(%arg0: i32) -> (i32, i32) {
    %c0_i32 = arith.constant 0 : i32
    %c0_i32_0 = arith.constant 0 : i32
    return %arg0, %c0_i32 : i32, i32
  }
}

</mosaic_0001>

<llo_original>
// kernel: constitutional_reward_head.1
$region0: #{constitutional_reward_head.1}
  #allocation0 [shape = 'u32[]', space=smem, size = 0x4, offset = 0x4, fixed_abs, tag = 'smem constant byte address 0x4 - core index']
  #allocation1 [shape = 'u32[72,128]{1,0:T(1,128)}', space=vmem, size = 0x9000, scoped, tag = 'internal scratch']
  %s0 = inlined_call_operand.vmem [shape: f32[8,32], index: 0, kind: input, shape index: {}]
  %s1 = inlined_call_operand.vmem [shape: bf16[32,16], index: 1, kind: input, shape index: {}]
  %s2 = inlined_call_operand.vmem [shape: f32[1,16], index: 2, kind: input, shape index: {}]
  %s3 = inlined_call_operand.vmem [shape: bf16[16,128], index: 3, kind: input, shape index: {}]
  %s4 = inlined_call_operand.vmem [shape: f32[1,128], index: 4, kind: input, shape index: {}]
  %s5 = inlined_call_operand.vmem [shape: f32[8,128], index: 5, kind: output, shape index: {}]
  %s6 = sld [smem:[#allocation0]]
  $region30: #{constitutional_reward_head.1} parent=0
    _
  %s8 = ssub.s32 1, %s6
  %s9 = scalar_select 0, %s8, %s6
  // Predicated region
  $region2: #{constitutional_reward_head.1} parent=0 // pred_check
    _
  $region3: #{constitutional_reward_head.1} parent=0 // pred_check_branch
    %11 = sbr.rel (0) target = $region5
  $region4: #{constitutional_reward_head.1} parent=0 // pred_region
    _
  $region5: #{constitutional_reward_head.1} parent=0 // pred_fallthru
    _
  // Predicated region
  $region6: #{constitutional_reward_head.1} parent=0 // pred_check
    _
  $region7: #{constitutional_reward_head.1} parent=0 // pred_check_branch
    %13 = sbr.rel (0) target = $region9
  $region8: #{constitutional_reward_head.1} parent=0 // pred_region
    _
  $region9: #{constitutional_reward_head.1} parent=0 // pred_fallthru
    _
  // Predicated region
  $region10: #{constitutional_reward_head.1} parent=0 // pred_check
    _
  $region11: #{constitutional_reward_head.1} parent=0 // pred_check_branch
    %15 = sbr.rel (0) target = $region13
  $region12: #{constitutional_reward_head.1} parent=0 // pred_region
    _
  $region13: #{constitutional_reward_head.1} parent=0 // pred_fallthru
    _
  // Predicated region
  $region14: #{constitutional_reward_head.1} parent=0 // pred_check
    _
  $region15: #{constitutional_reward_head.1} parent=0 // pred_check_branch
    %17 = sbr.rel (0) target = $region17
  $region16: #{constitutional_reward_head.1} parent=0 // pred_region
    _
  $region17: #{constitutional_reward_head.1} parent=0 // pred_fallthru
    _
  // Predicated region
  $region18: #{constitutional_reward_head.1} parent=0 // pred_check
    _
  $region19: #{constitutional_reward_head.1} parent=0 // pred_check_branch
    %19 = sbr.rel (0) target = $region21
  $region20: #{constitutional_reward_head.1} parent=0 // pred_region
    _
  $region21: #{constitutional_reward_head.1} parent=0 // pred_fallthru
    _
  %v21 = vld [vmem:[%s0] sm:$0xff]
  %v22 = vpack.c.bf16 %v21, %v21
  %v23 = vld [vmem:[%s1] sm:$0xf]
  %v24 = vld [vmem:[%s1 + $0x4] sm:$0xf]
  %v25 = vld [vmem:[%s1 + $0x8] sm:$0xf]
  %v26 = vld [vmem:[%s1 + $0xc] sm:$0xf]
  %v27 = vld [vmem:[%s2] sm:$0x1]
  %v29 = vperm.slane %v27, 0
  %v35 = vunpack.c.l.b16 %v23
  %v36 = vunpack.c.l.b16 %v24
  %v37 = vunpack.c.l.b16 %v25
  %v38 = vunpack.c.l.b16 %v26
  %v39 = vpack.c.b16 %v36, %v35
  %v40 = vpack.c.b16 %v38, %v37
  %vm43 = vcmask 261120
  %v45 = vsel %vm43, %v22, 0
  %47 = vmatpush.bf16.msra.mxu0 0
  %48 = vmatpush.bf16.msra.mxu0 0
  %49 = vmatpush.bf16.msra.mxu0 0
  %50 = vmatpush.bf16.msra.mxu0 0
  %51 = vmatpush.bf16.msra.mxu0 0
  %52 = vmatpush.bf16.msra.mxu0 0
  %53 = vmatpush.bf16.msra.mxu0 %v40
  %54 = vmatpush.bf16.msra.mxu0 %v39
  %55 = vmatmul.bf16.gmra.mxu0 %v45
  %v56 = vpop.f32.mrf.mxu0
  %v57 = vadd.f32 %v29, %v56
  %v58 = vpop.f32.mrf.mxu0
  %59 = vdwg.mxu0
  %v60 = vmax.f32 %v57, 0.0
  %v61 = vpack.c.bf16 %v60, %v60
  %v62 = vld [vmem:[%s3] sm:$0xf]
  %v63 = vld [vmem:[%s3 + $0x4] sm:$0xf]
  %v64 = vld [vmem:[%s4] sm:$0x1]
  %v66 = vperm.slane %v64, 0
  %v70 = vunpack.c.l.b16 %v62
  %v71 = vunpack.c.l.b16 %v63
  %v72 = vpack.c.b16 %v71, %v70
  %vm74 = vcmask 130048
  %v76 = vsel %vm74, %v61, 0
  %78 = vmatpush.bf16.msra.mxu0 0
  %79 = vmatpush.bf16.msra.mxu0 0
  %80 = vmatpush.bf16.msra.mxu0 0
  %81 = vmatpush.bf16.msra.mxu0 0
  %82 = vmatpush.bf16.msra.mxu0 0
  %83 = vmatpush.bf16.msra.mxu0 0
  %84 = vmatpush.bf16.msra.mxu0 0
  %85 = vmatpush.bf16.msra.mxu0 %v72
  %86 = vmatmul.bf16.gmra.mxu0 %v76
  %v87 = vpop.f32.mrf.mxu0
  %v88 = vadd.f32 %v66, %v87
  %v89 = vpop.f32.mrf.mxu0
  %90 = vdwg.mxu0
  %v91 = vxor.u32 %v88, 2147483648
  %v92 = vmul.f32 %v91, 1.442695
  %v93 = vpow.pop %v92
  %v94 = vadd.f32 %v93, 1.0
  %v95 = vrcp.pop %v94
  %v96 = vmul.f32 %v94, %v95
  %v97 = vsub.f32 1.0, %v96
  %v98 = vmul.f32 %v95, %v97
  %v99 = vadd.f32 %v95, %v98
  %vm100 = vweird.f32 %v94
  %vm101 = vweird.f32 %v95
  %vm102 = vmor %vm100, %vm101
  %v103 = vsel %vm102, %v95, %v99
  %v104 = vand.u32 2147483647, %v94
  %vm105 = vcmp.eq.f32.partialorder %v104, 8.507059e+37
  %v106 = vand.u32 %v94, 2147483648
  %v107 = vor.u32 1.1754944e-38, %v106
  %v108 = vsel %vm105, %v107, %v103
  %v109 = vmul.f32 1.0, %v108
  %110 = vst [vmem:[%s5] sm:$0xff] %v109
  // Predicated region
  $region22: #{constitutional_reward_head.1} parent=0 // pred_check
    _
  $region23: #{constitutional_reward_head.1} parent=0 // pred_check_branch
    %112 = sbr.rel (0) target = $region25
  $region24: #{constitutional_reward_head.1} parent=0 // pred_region
    _
  $region25: #{constitutional_reward_head.1} parent=0 // pred_fallthru
    _
  // Predicated region
  $region26: #{constitutional_reward_head.1} parent=0 // pred_check
    _
  $region27: #{constitutional_reward_head.1} parent=0 // pred_check_branch
    %114 = sbr.rel (0) target = $region29
  $region28: #{constitutional_reward_head.1} parent=0 // pred_region
    _
  $region29: #{constitutional_reward_head.1} parent=0 // pred_fallthru
    _

</llo_original>
